<compile_context>
chip_gen: v7x
topology: tpu7x:2x2x1
jax: 0.10.0
libtpu: 0.0.40
codegen_flags: <defaults>
</compile_context>

<pallas_src>
import math
import functools

import jax
import jax.numpy as jnp
from jax.experimental import pallas as pl
from jax.experimental.pallas import tpu as pltpu

_NEG_BIG = -1e30                        # finite "masked" value (avoids exp(-inf - -inf) NaNs)

# VMEM working-set budget used for tile selection.  Derived for v7x (64 MiB per
# TensorCore: keep double-buffered blocks + f32 accumulator under ~40 MiB);
# the same tiles are comfortably within v5e/v6e's 128 MiB.
_MM_VMEM_BUDGET = 40 * 1024 * 1024


def _pick_tile(dim, target, align=1):
    """Largest divisor of `dim` that is <= `target` (preferring multiples of `align`).

    Returns `dim` itself when it already fits the target.
    """
    if dim <= target:
        return dim
    best = 1
    for t in range(target, 0, -1):
        if dim % t == 0:
            if t % align == 0:
                return t
            if best == 1:
                best = t
    # TODO(synk): dims with no usable divisor (large primes) degrade to tiny
    #             tiles; proper handling needs padded/masked remainder tiles.
    return best


def _vmem_limit(need_bytes):
    """Scoped-VMEM limit: above the 16/32 MiB defaults, but v7x (64 MiB) safe."""
    return int(min(96 * 1024 * 1024, max(32 * 1024 * 1024, 1.5 * need_bytes)))


# ------------------------------ layernorm (fallback) -------------------------

def _layernorm_kernel(x_ref, g_ref, b_ref, o_ref, *, eps):
    x = x_ref[...].astype(jnp.float32)               # stats in f32
    mean = jnp.mean(x, axis=-1, keepdims=True)
    xc = x - mean
    var = jnp.mean(xc * xc, axis=-1, keepdims=True)
    y = xc * jax.lax.rsqrt(var + eps)
    y = y * g_ref[...].astype(jnp.float32) + b_ref[...].astype(jnp.float32)
    o_ref[...] = y.astype(o_ref.dtype)


def pallas_layernorm(x, g, b, eps=1e-5):
    """Standalone LN; only used when the LN->GEMM fusion can't fit a full-K tile."""
    M, C = x.shape
    itemsize = x.dtype.itemsize
    # memory-bound: keep the double-buffered (in + out) row block around ~8 MiB
    tm_target = max(8, min(1024, (8 * 1024 * 1024) // max(1, 4 * C * itemsize)))
    tm = _pick_tile(M, tm_target, 8)
    need = 4 * tm * C * itemsize
    return pl.pallas_call(
        functools.partial(_layernorm_kernel, eps=eps),
        out_shape=jax.ShapeDtypeStruct((M, C), x.dtype),
        grid=(M // tm,),
        in_specs=[pl.BlockSpec((tm, C), lambda i: (i, 0)),
                  pl.BlockSpec((1, C), lambda i: (0, 0)),
                  pl.BlockSpec((1, C), lambda i: (0, 0))],
        out_specs=pl.BlockSpec((tm, C), lambda i: (i, 0)),
        compiler_params=pltpu.CompilerParams(
            dimension_semantics=("parallel",),
            vmem_limit_bytes=_vmem_limit(need)),
    )(x, g, b)


# --------------------------- tiled matmul kernel ----------------------------
# y = act(LN(x) @ w + b) + residual    (LN / bias / activation / residual optional)

def _mm_workset(tm, tn, tk, itemsize):
    # double-buffered x / w / out / residual blocks + f32 accumulator
    return (2 * (tm * tk + tk * tn) + 4 * tm * tn) * itemsize + 4 * tm * tn


def _select_matmul_tiles(M, N, K, itemsize, full_k):
    sub_align = 16 if itemsize == 2 else 8       # bf16 sublane packing
    tm = _pick_tile(M, 512, sub_align)
    tn = _pick_tile(N, 512, 128)
    tk = K if full_k else _pick_tile(K, 1024, 128)
    while _mm_workset(tm, tn, tk, itemsize) > _MM_VMEM_BUDGET:
        if (not full_k) and tk > 256 and tk >= max(tm, tn):
            tk = _pick_tile(K, tk // 2, 128)
        elif tn > 128:
            tn = _pick_tile(N, tn // 2, 128)
        elif tm > 128:
            tm = _pick_tile(M, tm // 2, sub_align)
        elif (not full_k) and tk > 256:
            tk = _pick_tile(K, tk // 2, 128)
        else:
            break
    return tm, tn, tk


def _matmul_kernel(*refs, activation, has_ln, has_bias, has_residual, ln_eps):
    idx = 0
    x_ref = refs[idx]; idx += 1
    w_ref = refs[idx]; idx += 1
    g_ref = bln_ref = b_ref = r_ref = None
    if has_ln:
        g_ref = refs[idx]; idx += 1
        bln_ref = refs[idx]; idx += 1
    if has_bias:
        b_ref = refs[idx]; idx += 1
    if has_residual:
        r_ref = refs[idx]; idx += 1
    o_ref, acc_ref = refs[idx], refs[idx + 1]

    kk = pl.program_id(2)
    nk = pl.num_programs(2)

    @pl.when(kk == 0)
    def _():
        acc_ref[...] = jnp.zeros_like(acc_ref)

    x = x_ref[...]
    if has_ln:
        # LayerNorm fused into the GEMM prologue (x block spans the full K dim).
        xf = x.astype(jnp.float32)
        mu = jnp.mean(xf, axis=-1, keepdims=True)
        xc = xf - mu
        var = jnp.mean(xc * xc, axis=-1, keepdims=True)
        xn = xc * jax.lax.rsqrt(var + ln_eps)
        xn = xn * g_ref[...].astype(jnp.float32) + bln_ref[...].astype(jnp.float32)
        x = xn.astype(x_ref.dtype)

    acc_ref[...] += jnp.dot(x, w_ref[...], preferred_element_type=jnp.float32)

    @pl.when(kk == nk - 1)
    def _():
        y = acc_ref[...]
        if has_bias:
            y = y + b_ref[...].astype(jnp.float32)
        if activation == "gelu":
            # exact (erf-based) GELU, matching torch.nn.GELU()
            # TODO(synk): tanh-approx GELU (EUP tanh) is cheaper if numerics allow.
            y = 0.5 * y * (1.0 + jax.lax.erf(y * (1.0 / math.sqrt(2.0))))
        if has_residual:
            y = y + r_ref[...].astype(jnp.float32)
        o_ref[...] = y.astype(o_ref.dtype)


def pallas_matmul(x, w, b=None, residual=None, activation=None, ln=None,
                  ln_eps=1e-5):
    M, K = x.shape
    N = w.shape[1]
    itemsize = x.dtype.itemsize

    if ln is not None:
        tm, tn, tk = _select_matmul_tiles(M, N, K, itemsize, full_k=True)
        if _mm_workset(tm, tn, tk, itemsize) > _MM_VMEM_BUDGET:
            # full-K block too big to fuse LN -> standalone LN pass instead
            x = pallas_layernorm(x, ln[0], ln[1], eps=ln_eps)
            ln = None
            tm, tn, tk = _select_matmul_tiles(M, N, K, itemsize, full_k=False)
    else:
        tm, tn, tk = _select_matmul_tiles(M, N, K, itemsize, full_k=False)

    grid = (M // tm, N // tn, K // tk)

    in_specs = [pl.BlockSpec((tm, tk), lambda i, j, k: (i, k)),
                pl.BlockSpec((tk, tn), lambda i, j, k: (k, j))]
    args = [x, w]
    if ln is not None:
        in_specs += [pl.BlockSpec((1, K), lambda i, j, k: (0, 0)),
                     pl.BlockSpec((1, K), lambda i, j, k: (0, 0))]
        args += [ln[0], ln[1]]
    if b is not None:
        in_specs.append(pl.BlockSpec((1, tn), lambda i, j, k: (0, j)))
        args.append(b)
    if residual is not None:
        in_specs.append(pl.BlockSpec((tm, tn), lambda i, j, k: (i, j)))
        args.append(residual)

    bytes_accessed = (M * K + K * N + M * N) * itemsize
    if b is not None:
        bytes_accessed += N * itemsize
    if residual is not None:
        bytes_accessed += M * N * itemsize

    need = _mm_workset(tm, tn, tk, itemsize)

    return pl.pallas_call(
        functools.partial(_matmul_kernel, activation=activation,
                          has_ln=ln is not None, has_bias=b is not None,
                          has_residual=residual is not None, ln_eps=ln_eps),
        out_shape=jax.ShapeDtypeStruct((M, N), x.dtype),
        grid=grid,
        in_specs=in_specs,
        out_specs=pl.BlockSpec((tm, tn), lambda i, j, k: (i, j)),
        scratch_shapes=[pltpu.VMEM((tm, tn), jnp.float32)],
        compiler_params=pltpu.CompilerParams(
            dimension_semantics=("parallel", "parallel", "arbitrary"),
            vmem_limit_bytes=_vmem_limit(need)),
        cost_estimate=pl.CostEstimate(
            flops=2 * M * N * K,
            transcendentals=(M * N if activation == "gelu" else 0),
            bytes_accessed=int(bytes_accessed)),
    )(*args)


# -------------------- flash-style causal self-attention ---------------------
# q, k, v : (B*H, T, hd).  grid = (head blocks, q tiles, kv tiles)

def _flash_attn_kernel(q_ref, k_ref, v_ref, o_ref, qs_ref, m_ref, l_ref, acc_ref,
                       *, scale):
    qi = pl.program_id(1)
    ki = pl.program_id(2)
    nk = pl.num_programs(2)
    tq = q_ref.shape[1]
    tkv = k_ref.shape[1]

    q_start = qi * tq
    kv_start = ki * tkv

    @pl.when(ki == 0)
    def _():
        m_ref[...] = jnp.full_like(m_ref, _NEG_BIG)
        l_ref[...] = jnp.zeros_like(l_ref)
        acc_ref[...] = jnp.zeros_like(acc_ref)
        # fold 1/sqrt(hd) into q once per q tile (constant along the kv axis)
        qs_ref[...] = q_ref[...] * scale

    def scores():
        return jnp.einsum('hqd,hkd->hqk', qs_ref[...], k_ref[...],
                          preferred_element_type=jnp.float32)

    def online_update(s):
        m_prev = m_ref[...]
        m_new = jnp.maximum(m_prev, jnp.max(s, axis=-1, keepdims=True))
        alpha = jnp.exp(m_prev - m_new)
        p = jnp.exp(s - m_new)        # f32 exp (v5e EUP has no bf16)
        l_ref[...] = alpha * l_ref[...] + jnp.sum(p, axis=-1, keepdims=True)
        acc_ref[...] = alpha * acc_ref[...] + jnp.einsum(
            'hqk,hkd->hqd', p.astype(v_ref.dtype), v_ref[...],
            preferred_element_type=jnp.float32)
        m_ref[...] = m_new

    valid = kv_start <= q_start + tq - 1        # tile not entirely in the future
    straddles = kv_start + tkv - 1 > q_start    # tile crosses the causal diagonal

    @pl.when(valid & straddles)
    def _():
        s = scores()
        rows = q_start + jax.lax.broadcasted_iota(jnp.int32, s.shape, 1)
        cols = kv_start + jax.lax.broadcasted_iota(jnp.int32, s.shape, 2)
        online_update(jnp.where(cols <= rows, s, _NEG_BIG))

    @pl.when(valid & jnp.logical_not(straddles))
    def _():
        online_update(scores())                  # fully-past tile: no mask needed

    @pl.when(ki == nk - 1)
    def _():
        inv_l = pl.reciprocal(l_ref[...], approx=True)   # EUP slot, ~free
        o_ref[...] = (acc_ref[...] * inv_l).astype(o_ref.dtype)


def pallas_flash_attention(q, k, v, scale, *, hb_target=8, tq_target=256,
                           tkv_target=512):
    BH, T, hd = q.shape
    itemsize = q.dtype.itemsize
    sub_align = 16 if itemsize == 2 else 8

    hb = _pick_tile(BH, hb_target)
    tq = _pick_tile(T, tq_target, sub_align)
    tkv = _pick_tile(T, tkv_target, sub_align)
    # keep >=2 blocks on a parallel grid axis when possible (v7x has 2 TensorCores)
    if BH // hb < 2 and T // tq < 2 and hb > 1:
        hb = _pick_tile(BH, max(1, hb // 2))
    grid = (BH // hb, T // tq, T // tkv)

    q_spec = pl.BlockSpec((hb, tq, hd), lambda h, i, j: (h, i, 0))
    # Clamp the kv block index so causally-skipped (fully-future) tiles alias the
    # last valid block: no new DMA is issued for them; compute is gated in-kernel.
    kv_spec = pl.BlockSpec(
        (hb, tkv, hd),
        lambda h, i, j: (h, jnp.minimum(j, (i * tq + tq - 1) // tkv), 0))

    need = (2 * (2 * hb * tq * hd + 2 * hb * tkv * hd) * itemsize   # q/k/v/o double-buffered
            + hb * tq * hd * itemsize                                # scaled-q scratch
            + hb * tq * hd * 4 + 4 * hb * tq * 2)                    # acc + m/l (f32)

    # TODO(synk): head split/merge still happens in XLA outside this kernel; a
    #             head-packed lane-dense (>=128 lane) output slab written
    #             straight into (B*T, C) would remove 4 HBM round trips.
    return pl.pallas_call(
        functools.partial(_flash_attn_kernel, scale=scale),
        out_shape=jax.ShapeDtypeStruct((BH, T, hd), q.dtype),
        grid=grid,
        in_specs=[q_spec, kv_spec, kv_spec],
        out_specs=pl.BlockSpec((hb, tq, hd), lambda h, i, j: (h, i, 0)),
        scratch_shapes=[pltpu.VMEM((hb, tq, hd), q.dtype),      # scaled q
                        pltpu.VMEM((hb, tq, 1), jnp.float32),   # m
                        pltpu.VMEM((hb, tq, 1), jnp.float32),   # l
                        pltpu.VMEM((hb, tq, hd), jnp.float32)], # acc
        compiler_params=pltpu.CompilerParams(
            dimension_semantics=("parallel", "parallel", "arbitrary"),
            vmem_limit_bytes=_vmem_limit(need)),
        cost_estimate=pl.CostEstimate(
            flops=4 * BH * T * T * hd,
            transcendentals=BH * T * T,
            bytes_accessed=int(4 * BH * T * hd * itemsize)),
    )(q, k, v)


# ------------------------------ Block forward -------------------------------

def init_block_params(key, n_embd, dtype=jnp.float32):
    C = n_embd
    keys = jax.random.split(key, 8)

    def normal(k, shape, std=0.02):
        return (std * jax.random.normal(k, shape, jnp.float32)).astype(dtype)

    return {
        "ln1_g": jnp.ones((1, C), dtype), "ln1_b": jnp.zeros((1, C), dtype),
        "ln2_g": jnp.ones((1, C), dtype), "ln2_b": jnp.zeros((1, C), dtype),
        # fused QKV projection (concatenation of the three nn.Linear weights)
        "w_qkv": normal(keys[0], (C, 3 * C)), "b_qkv": normal(keys[1], (1, 3 * C)),
        "w_proj": normal(keys[2], (C, C)),    "b_proj": normal(keys[3], (1, C)),
        "w_fc":  normal(keys[4], (C, 4 * C)), "b_fc":  normal(keys[5], (1, 4 * C)),
        "w_out": normal(keys[6], (4 * C, C)), "b_out": normal(keys[7], (1, C)),
    }


def block_forward(params, x, n_head):
    """Pallas forward of the minGPT Block.  x: (B, T, C)."""
    B, T, C = x.shape
    H, hd = n_head, C // n_head
    x2 = x.reshape(B * T, C)

    # ---- x = x + attn(ln1(x)) ----   (LN fused into the fused QKV GEMM prologue)
    qkv = pallas_matmul(x2, params["w_qkv"], params["b_qkv"],
                        ln=(params["ln1_g"], params["ln1_b"]))
    q2, k2, v2 = jnp.split(qkv, 3, axis=-1)

    # TODO(synk): to_heads/from_heads transposes still run in XLA; emitting a
    #             head-packed lane-dense layout from the QKV GEMM / attention
    #             out_spec would remove 4 full (B*T, C) HBM round trips.
    def to_heads(t):
        return t.reshape(B, T, H, hd).transpose(0, 2, 1, 3).reshape(B * H, T, hd)

    y = pallas_flash_attention(to_heads(q2), to_heads(k2), to_heads(v2),
                               scale=1.0 / math.sqrt(hd))
    y2 = y.reshape(B, H, T, hd).transpose(0, 2, 1, 3).reshape(B * T, C)
    # output projection with the residual add fused into the matmul epilogue
    x2 = pallas_matmul(y2, params["w_proj"], params["b_proj"], residual=x2)

    # ---- x = x + mlp(ln2(x)) ----    (LN fused into the fc GEMM; GELU in epilogue)
    m = pallas_matmul(x2, params["w_fc"], params["b_fc"], activation="gelu",
                      ln=(params["ln2_g"], params["ln2_b"]))
    x2 = pallas_matmul(m, params["w_out"], params["b_out"], residual=x2)

    return x2.reshape(B, T, C)


# --------------------------- pure-JAX reference ------------------------------

def block_reference(params, x, n_head):
    B, T, C = x.shape
    H, hd = n_head, C // n_head
    f32 = lambda t: t.astype(jnp.float32)

    def ln(z, g, b):
        mu = jnp.mean(z, -1, keepdims=True)
        var = jnp.mean((z - mu) ** 2, -1, keepdims=True)
        return (z - mu) * jax.lax.rsqrt(var + 1e-5) * g[0] + b[0]

    x = f32(x)
    h = ln(x, f32(params["ln1_g"]), f32(params["ln1_b"]))
    qkv = h @ f32(params["w_qkv"]) + f32(params["b_qkv"])[0]
    q, k, v = jnp.split(qkv, 3, axis=-1)

    def heads(t):
        return t.reshape(B, T, H, hd).transpose(0, 2, 1, 3)

    q, k, v = heads(q), heads(k), heads(v)
    att = (q @ jnp.swapaxes(k, -2, -1)) / math.sqrt(hd)
    mask = jnp.tril(jnp.ones((T, T), bool))
    att = jnp.where(mask, att, -jnp.inf)
    att = jax.nn.softmax(att, axis=-1)
    y = (att @ v).transpose(0, 2, 1, 3).reshape(B, T, C)
    x = x + y @ f32(params["w_proj"]) + f32(params["b_proj"])[0]

    h2 = ln(x, f32(params["ln2_g"]), f32(params["ln2_b"]))
    m = jax.nn.gelu(h2 @ f32(params["w_fc"]) + f32(params["b_fc"])[0],
                    approximate=False)
    x = x + m @ f32(params["w_out"]) + f32(params["b_out"])[0]
    return x


# ----------------------------------- main ------------------------------------

if __name__ == "__main__":
    B, T, C, H = 2, 8, 32, 4                      # small demo shapes
    key = jax.random.PRNGKey(0)
    pkey, xkey = jax.random.split(key)

    params = init_block_params(pkey, C, dtype=jnp.float32)
    x = jax.random.normal(xkey, (B, T, C), jnp.float32)

    # f32 run + correctness vs pure-JAX reference
    out = jax.block_until_ready(block_forward(params, x, H))
    assert out.shape == (B, T, C)
    ref = block_reference(params, x, H)
    assert jnp.allclose(out, ref, atol=1e-3, rtol=1e-3), "f32 mismatch vs reference"

    # bf16 run (MXU-native path) — loose tolerance vs the f32 reference
    params_bf16 = jax.tree_util.tree_map(lambda t: t.astype(jnp.bfloat16), params)
    out_bf16 = jax.block_until_ready(
        block_forward(params_bf16, x.astype(jnp.bfloat16), H))
    assert out_bf16.shape == (B, T, C)
    assert jnp.allclose(out_bf16.astype(jnp.float32), ref, atol=1e-1, rtol=1e-1), \
        "bf16 mismatch vs reference"

    # TODO(synk): dropout (attn/resid) is identity (eval mode); training parity
    #             would need a PRNG-based dropout kernel.
    print("KERNEL_OK")
</pallas_src>

<mosaic_0001>
module attributes {stable_mosaic.version = 11 : i64} {
  func.func @_matmul_kernel(%arg0: i32, %arg1: i32, %arg2: i32, %arg3: memref<16x32xf32, #tpu.memory_space<vmem>>, %arg4: memref<32x96xf32, #tpu.memory_space<vmem>>, %arg5: memref<1x32xf32, #tpu.memory_space<vmem>>, %arg6: memref<1x32xf32, #tpu.memory_space<vmem>>, %arg7: memref<1x96xf32, #tpu.memory_space<vmem>>, %arg8: memref<16x96xf32, #tpu.memory_space<vmem>>, %arg9: memref<16x96xf32, #tpu.memory_space<vmem>>) attributes {dimension_semantics = [#tpu.dimension_semantics<parallel>, #tpu.dimension_semantics<parallel>, #tpu.dimension_semantics<arbitrary>], iteration_bounds = array<i64: 1, 1, 1>, scalar_prefetch = 0 : i64, scratch_operands = 1 : i64, tpu.core_type = #tpu.core_type<tc>, window_params = [{transform_indices = @transform_0, window_bounds = array<i64: 16, 32>}, {transform_indices = @transform_1, window_bounds = array<i64: 32, 96>}, {pipeline_mode = #tpu.pipeline_mode<synchronous>, transform_indices = @transform_2, window_bounds = array<i64: 1, 32>}, {pipeline_mode = #tpu.pipeline_mode<synchronous>, transform_indices = @transform_3, window_bounds = array<i64: 1, 32>}, {transform_indices = @transform_4, window_bounds = array<i64: 1, 96>}, {transform_indices = @transform_5, window_bounds = array<i64: 16, 96>}]} {
    %c0_i32 = arith.constant 0 : i32
    %0 = arith.cmpi eq, %arg2, %c0_i32 : i32
    %1 = arith.extui %0 : i1 to i32
    %c0_i32_0 = arith.constant 0 : i32
    %2 = arith.cmpi ne, %1, %c0_i32_0 : i32
    scf.if %2 {
      %cst_19 = arith.constant 0.000000e+00 : f32
      %34 = vector.broadcast %cst_19 : f32 to vector<16x96xf32>
      %c0_20 = arith.constant 0 : index
      %c0_21 = arith.constant 0 : index
      %35 = vector.load %arg9[%c0_20, %c0_21] : memref<16x96xf32, #tpu.memory_space<vmem>>, vector<16x96xf32>
      tpu.vector_store %arg9[%c0_20, %c0_21], %34 {strides = array<i32>} : memref<16x96xf32, #tpu.memory_space<vmem>>, vector<16x96xf32>,
    } else {
    }
    %c0 = arith.constant 0 : index
    %c0_1 = arith.constant 0 : index
    %3 = vector.load %arg3[%c0, %c0_1] : memref<16x32xf32, #tpu.memory_space<vmem>>, vector<16x32xf32>
    %cst = arith.constant dense<0.000000e+00> : vector<16xf32>
    %4 = vector.multi_reduction <add>, %3, %cst [1] : vector<16x32xf32> to vector<16xf32>
    %5 = vector.shape_cast %4 : vector<16xf32> to vector<16x1xf32>
    %cst_2 = arith.constant 3.200000e+01 : f32
    %6 = vector.broadcast %cst_2 : f32 to vector<16x1xf32>
    %7 = arith.divf %5, %6 : vector<16x1xf32>
    %8 = vector.broadcast %7 : vector<16x1xf32> to vector<16x32xf32>
    %9 = arith.subf %3, %8 : vector<16x32xf32>
    %10 = arith.mulf %9, %9 : vector<16x32xf32>
    %cst_3 = arith.constant dense<0.000000e+00> : vector<16xf32>
    %11 = vector.multi_reduction <add>, %10, %cst_3 [1] : vector<16x32xf32> to vector<16xf32>
    %12 = vector.shape_cast %11 : vector<16xf32> to vector<16x1xf32>
    %cst_4 = arith.constant 3.200000e+01 : f32
    %13 = vector.broadcast %cst_4 : f32 to vector<16x1xf32>
    %14 = arith.divf %12, %13 : vector<16x1xf32>
    %cst_5 = arith.constant 9.99999974E-6 : f32
    %15 = vector.broadcast %cst_5 : f32 to vector<16x1xf32>
    %16 = arith.addf %14, %15 : vector<16x1xf32>
    %17 = math.rsqrt %16 : vector<16x1xf32>
    %18 = vector.broadcast %17 : vector<16x1xf32> to vector<16x32xf32>
    %19 = arith.mulf %9, %18 : vector<16x32xf32>
    %c0_6 = arith.constant 0 : index
    %c0_7 = arith.constant 0 : index
    %20 = vector.load %arg5[%c0_6, %c0_7] : memref<1x32xf32, #tpu.memory_space<vmem>>, vector<1x32xf32>
    %21 = vector.broadcast %20 : vector<1x32xf32> to vector<16x32xf32>
    %22 = arith.mulf %19, %21 : vector<16x32xf32>
    %c0_8 = arith.constant 0 : index
    %c0_9 = arith.constant 0 : index
    %23 = vector.load %arg6[%c0_8, %c0_9] : memref<1x32xf32, #tpu.memory_space<vmem>>, vector<1x32xf32>
    %24 = vector.broadcast %23 : vector<1x32xf32> to vector<16x32xf32>
    %25 = arith.addf %22, %24 : vector<16x32xf32>
    %c0_10 = arith.constant 0 : index
    %c0_11 = arith.constant 0 : index
    %26 = vector.load %arg9[%c0_10, %c0_11] : memref<16x96xf32, #tpu.memory_space<vmem>>, vector<16x96xf32>
    %c0_12 = arith.constant 0 : index
    %c0_13 = arith.constant 0 : index
    %27 = vector.load %arg4[%c0_12, %c0_13] : memref<32x96xf32, #tpu.memory_space<vmem>>, vector<32x96xf32>
    %cst_14 = arith.constant dense<0.000000e+00> : vector<16x96xf32>
    %28 = tpu.matmul %25, %27, %cst_14 {dimension_numbers = #tpu.dot_dimension_numbers<[1], [0], [0], [1], [0, 0, 1, 1], [], []>} : vector<16x32xf32>, vector<32x96xf32>, vector<16x96xf32> -> vector<16x96xf32>
    %29 = arith.addf %26, %28 : vector<16x96xf32>
    %c0_15 = arith.constant 0 : index
    %c0_16 = arith.constant 0 : index
    %30 = vector.load %arg9[%c0_15, %c0_16] : memref<16x96xf32, #tpu.memory_space<vmem>>, vector<16x96xf32>
    tpu.vector_store %arg9[%c0_15, %c0_16], %29 {strides = array<i32>} : memref<16x96xf32, #tpu.memory_space<vmem>>, vector<16x96xf32>,
    %c0_i32_17 = arith.constant 0 : i32
    %31 = arith.cmpi eq, %arg2, %c0_i32_17 : i32
    %32 = arith.extui %31 : i1 to i32
    %c0_i32_18 = arith.constant 0 : i32
    %33 = arith.cmpi ne, %32, %c0_i32_18 : i32
    scf.if %33 {
      %c0_19 = arith.constant 0 : index
      %c0_20 = arith.constant 0 : index
      %34 = vector.load %arg9[%c0_19, %c0_20] : memref<16x96xf32, #tpu.memory_space<vmem>>, vector<16x96xf32>
      %c0_21 = arith.constant 0 : index
      %c0_22 = arith.constant 0 : index
      %35 = vector.load %arg7[%c0_21, %c0_22] : memref<1x96xf32, #tpu.memory_space<vmem>>, vector<1x96xf32>
      %36 = vector.broadcast %35 : vector<1x96xf32> to vector<16x96xf32>
      %37 = arith.addf %34, %36 : vector<16x96xf32>
      %c0_23 = arith.constant 0 : index
      %c0_24 = arith.constant 0 : index
      %38 = vector.load %arg8[%c0_23, %c0_24] : memref<16x96xf32, #tpu.memory_space<vmem>>, vector<16x96xf32>
      tpu.vector_store %arg8[%c0_23, %c0_24], %37 {strides = array<i32>} : memref<16x96xf32, #tpu.memory_space<vmem>>, vector<16x96xf32>,
    } else {
    }
    return
  }
  func.func @transform_0(%arg0: i32, %arg1: i32, %arg2: i32) -> (i32, i32) {
    %c0_i32 = arith.constant 0 : i32
    return %arg0, %arg2 : i32, i32
  }
  func.func @transform_1(%arg0: i32, %arg1: i32, %arg2: i32) -> (i32, i32) {
    %c0_i32 = arith.constant 0 : i32
    return %arg2, %arg1 : i32, i32
  }
  func.func @transform_2(%arg0: i32, %arg1: i32, %arg2: i32) -> (i32, i32) {
    %c0_i32 = arith.constant 0 : i32
    %c0_i32_0 = arith.constant 0 : i32
    %c0_i32_1 = arith.constant 0 : i32
    return %c0_i32, %c0_i32_0 : i32, i32
  }
  func.func @transform_3(%arg0: i32, %arg1: i32, %arg2: i32) -> (i32, i32) {
    %c0_i32 = arith.constant 0 : i32
    %c0_i32_0 = arith.constant 0 : i32
    %c0_i32_1 = arith.constant 0 : i32
    return %c0_i32, %c0_i32_0 : i32, i32
  }
  func.func @transform_4(%arg0: i32, %arg1: i32, %arg2: i32) -> (i32, i32) {
    %c0_i32 = arith.constant 0 : i32
    %c0_i32_0 = arith.constant 0 : i32
    return %c0_i32, %arg1 : i32, i32
  }
  func.func @transform_5(%arg0: i32, %arg1: i32, %arg2: i32) -> (i32, i32) {
    %c0_i32 = arith.constant 0 : i32
    return %arg0, %arg1 : i32, i32
  }
}

</mosaic_0001>

<llo_original>
// kernel: tpu_custom_call.1
$region0: #{tpu_custom_call.1}
  #allocation0 [shape = 'u32[]', space=smem, size = 0x4, offset = 0x4, fixed_abs, tag = 'smem constant byte address 0x4 - core index']
  #allocation1 [shape = 'u32[144,128]{1,0:T(1,128)}', space=vmem, size = 0x12000, scoped, tag = 'internal scratch']
  #allocation2 [shape = 'f32[16,96]{1,0:T(8,128)}', space=vmem, size = 0x2000, scoped, tag = 'scratch operand']
  %s0 = inlined_call_operand.hbm [shape: f32[16,32], index: 0, kind: input, shape index: {}]
  %s1 = inlined_call_operand.hbm [shape: f32[32,96], index: 1, kind: input, shape index: {}]
  %s2 = inlined_call_operand.vmem [shape: f32[1,32], index: 2, kind: input, shape index: {}]
  %s3 = inlined_call_operand.vmem [shape: f32[1,32], index: 3, kind: input, shape index: {}]
  %s4 = inlined_call_operand.vmem [shape: f32[1,96], index: 4, kind: input, shape index: {}]
  %s5 = inlined_call_operand.hbm [shape: f32[16,96], index: 5, kind: output, shape index: {}]
  %s6 = sld [smem:[#allocation0]]
  $region46: #{tpu_custom_call.1} parent=0
    _
  %s8 = ssub.s32 1, %s6
  %s9 = scalar_select 0, %s8, %s6
  $region1: #{tpu_custom_call.1} parent=0
    #allocation3 [shape = 'u8[8192]{0}', space=vmem, size = 0x2000, scoped, tag = 'input window, operand 0, single buffered']
    #allocation4 [shape = 's32[1]{0}', space=sflag, size = 0x4, scoped, tag = 'scoped memory for tpu_custom_call.1']
    #allocation5 [shape = 's32[1]{0}', space=sflag, size = 0x4, scoped, tag = 'scoped memory for tpu_custom_call.1']
    #allocation6 [shape = 'u8[16384]{0}', space=vmem, size = 0x4000, scoped, tag = 'input window, operand 1, single buffered']
    #allocation7 [shape = 's32[1]{0}', space=sflag, size = 0x4, scoped, tag = 'scoped memory for tpu_custom_call.1']
    #allocation8 [shape = 'u8[8192]{0}', space=vmem, size = 0x2000, scoped, tag = 'output window, operand 0, single buffered']
    %10 = vsyncpa [#allocation4], 0
    %11 = vsyncpa [#allocation7], 0
    %12 = vsyncpa [#allocation5], 0
    // Predicated region
    $region2: #{tpu_custom_call.1} parent=1 // pred_check
      _
    $region3: #{tpu_custom_call.1} parent=1 // pred_check_branch
      %14 = sbr.rel (0) target = $region5
    $region4: #{tpu_custom_call.1} parent=1 // pred_region
      %s16 = ssub.s32 256, 256
      %17 = vsyncadd [#allocation4], %s16
      %s18 = sshll.u32 [#allocation3], 4
      %s19 = int_to_ptr.vmem [resolvable:$true] %s18
      %24 = dma.hbm_to_vmem [thread:$0]  %s0, 256, %s19, [#allocation4], 128, 128, 8
    $region5: #{tpu_custom_call.1} parent=1 // pred_fallthru
      _
    // Predicated region
    $region6: #{tpu_custom_call.1} parent=1 // pred_check
      _
    $region7: #{tpu_custom_call.1} parent=1 // pred_check_branch
      %26 = sbr.rel (0) target = $region9
    $region8: #{tpu_custom_call.1} parent=1 // pred_region
      %s28 = ssub.s32 512, 512
      %29 = vsyncadd [#allocation7], %s28
      %s30 = sshll.u32 [#allocation6], 4
      %s31 = int_to_ptr.vmem [resolvable:$true] %s30
      %36 = dma.hbm_to_vmem [thread:$0]  %s1, 512, %s31, [#allocation7], 128, 128, 8
    $region9: #{tpu_custom_call.1} parent=1 // pred_fallthru
      _
    // Predicated region
    $region10: #{tpu_custom_call.1} parent=1 // pred_check
      _
    $region11: #{tpu_custom_call.1} parent=1 // pred_check_branch
      %38 = sbr.rel (0) target = $region13
    $region12: #{tpu_custom_call.1} parent=1 // pred_region
      _
    $region13: #{tpu_custom_call.1} parent=1 // pred_fallthru
      _
    // Predicated region
    $region14: #{tpu_custom_call.1} parent=1 // pred_check
      _
    $region15: #{tpu_custom_call.1} parent=1 // pred_check_branch
      %40 = sbr.rel (0) target = $region17
    $region16: #{tpu_custom_call.1} parent=1 // pred_region
      _
    $region17: #{tpu_custom_call.1} parent=1 // pred_fallthru
      _
    // Predicated region
    $region18: #{tpu_custom_call.1} parent=1 // pred_check
      _
    $region19: #{tpu_custom_call.1} parent=1 // pred_check_branch
      %42 = sbr.rel (0) target = $region21
    $region20: #{tpu_custom_call.1} parent=1 // pred_region
      _
    $region21: #{tpu_custom_call.1} parent=1 // pred_fallthru
      _
    // Predicated region
    $region22: #{tpu_custom_call.1} parent=1 // pred_check
      _
    $region23: #{tpu_custom_call.1} parent=1 // pred_check_branch
      %44 = sbr.rel (0) target = $region25
    $region24: #{tpu_custom_call.1} parent=1 // pred_region
      %45 = dma.done [#allocation4], 256
    $region25: #{tpu_custom_call.1} parent=1 // pred_fallthru
      _
    // Predicated region
    $region26: #{tpu_custom_call.1} parent=1 // pred_check
      _
    $region27: #{tpu_custom_call.1} parent=1 // pred_check_branch
      %47 = sbr.rel (0) target = $region29
    $region28: #{tpu_custom_call.1} parent=1 // pred_region
      %48 = dma.done [#allocation7], 512
    $region29: #{tpu_custom_call.1} parent=1 // pred_fallthru
      _
    %p49 = scmp.eq.s32.totalorder 0, 0
    // Predicated region
    $region30: #{tpu_custom_call.1} parent=1 // pred_check
      %p50 = pneg %p49
    $region31: #{tpu_custom_call.1} parent=1 // pred_check_branch
      %52 = sbr.rel (%p50) target = $region33
    $region32: #{tpu_custom_call.1} parent=1 // pred_region
      %vm53 = vcmask 785408
      %54 = vst.msk [vmem:[#allocation2] sm:$0xff] %vm53, 0.0
      %55 = vst.msk [vmem:[#allocation2 + $0x8] sm:$0xff] %vm53, 0.0
    $region33: #{tpu_custom_call.1} parent=1 // pred_fallthru
      _
    %v56 = vld [vmem:[#allocation3] sm:$0xff]
    %v57 = vld [vmem:[#allocation3 + $0x8] sm:$0xff]
    %vm58 = vcmask 261120
    %v59 = vsel %vm58, %v56, 0.0
    %60 = vadd.xlane.f32.xlu0 %v59
    %v61 = vpop.xlane.xlu0 %60
    %v62 = vsel %vm58, %v57, 0.0
    %63 = vadd.xlane.f32.xlu0 %v62
    %v64 = vpop.xlane.xlu0 %63
    %v65 = vrcp.pop 32.0
    %v66 = vmul.f32 %v61, %v65
    %v67 = vmul.f32 %v64, %v65
    %v68 = vsub.f32 %v56, %v66
    %v69 = vsub.f32 %v57, %v67
    %v70 = vmul.f32 %v68, %v68
    %v71 = vmul.f32 %v69, %v69
    %v72 = vsel %vm58, %v70, 0.0
    %73 = vadd.xlane.f32.xlu0 %v72
    %v74 = vpop.xlane.xlu0 %73
    %v75 = vsel %vm58, %v71, 0.0
    %76 = vadd.xlane.f32.xlu0 %v75
    %v77 = vpop.xlane.xlu0 %76
    %v78 = vmul.f32 %v74, %v65
    %v79 = vmul.f32 %v77, %v65
    %v80 = vadd.f32 %v78, 1e-05
    %v81 = vadd.f32 %v79, 1e-05
    %v82 = vrsqrt.pop %v80
    %v83 = vrsqrt.pop %v81
    %v84 = vmul.f32 %v68, %v82
    %v85 = vmul.f32 %v69, %v83
    %v86 = vld [vmem:[%s2] sm:$0x1]
    %v88 = vlaneseq
    %v89 = vshrl.u32 %v88, 7
    %v90 = vsub.s32 0, %v89
    %v91 = vrot.slane %v86, %v90
    %v93 = vmul.f32 %v84, %v91
    %v94 = vmul.f32 %v85, %v91
    %v95 = vld [vmem:[%s3] sm:$0x1]
    %v97 = vlaneseq
    %v98 = vshrl.u32 %v97, 7
    %v99 = vsub.s32 0, %v98
    %v100 = vrot.slane %v95, %v99
    %v102 = vadd.f32 %v93, %v100
    %v103 = vadd.f32 %v94, %v100
    %v104 = vld [vmem:[#allocation2] sm:$0xff]
    %v105 = vld [vmem:[#allocation2 + $0x8] sm:$0xff]
    %v106 = vld [vmem:[#allocation6] sm:$0xff]
    %v107 = vld [vmem:[#allocation6 + $0x8] sm:$0xff]
    %v108 = vld [vmem:[#allocation6 + $0x10] sm:$0xff]
    %v109 = vld [vmem:[#allocation6 + $0x18] sm:$0xff]
    %v111 = vsel %vm58, %v102, 0
    %v114 = vsel %vm58, %v103, 0
    %116 = vmatprep.subr.mxu0 0.0
    %117 = vmatpush1.msra.mxu0 %v106
    %118 = vmatprep.subr.mxu0 0.0
    %119 = vmatpush1.msra.mxu0 %v107
    %120 = vmatprep.subr.mxu0 0.0
    %121 = vmatpush1.msra.mxu0 %v108
    %122 = vmatprep.subr.mxu0 0.0
    %123 = vmatpush1.msra.mxu0 %v109
    %124 = vmatprep.subr.mxu0 0.0
    %125 = vmatpush1.msra.mxu0 0.0
    %126 = vmatprep.subr.mxu0 0.0
    %127 = vmatpush1.msra.mxu0 0.0
    %128 = vmatprep.subr.mxu0 0.0
    %129 = vmatpush1.msra.mxu0 0.0
    %130 = vmatprep.subr.mxu0 0.0
    %131 = vmatpush1.msra.mxu0 0.0
    %132 = vmatprep.subr.mxu0 0.0
    %133 = vmatpush1.msra.mxu0 0.0
    %134 = vmatprep.subr.mxu0 0.0
    %135 = vmatpush1.msra.mxu0 0.0
    %136 = vmatprep.subr.mxu0 0.0
    %137 = vmatpush1.msra.mxu0 0.0
    %138 = vmatprep.subr.mxu0 0.0
    %139 = vmatpush1.msra.mxu0 0.0
    %140 = vmatprep.subr.mxu0 0.0
    %141 = vmatpush1.msra.mxu0 0.0
    %142 = vmatprep.subr.mxu0 0.0
    %143 = vmatpush1.msra.mxu0 0.0
    %144 = vmatprep.subr.mxu0 0.0
    %145 = vmatpush1.msra.mxu0 0.0
    %146 = vmatprep.subr.mxu0 0.0
    %147 = vmatpush1.msra.mxu0 0.0
    %148 = vmatprep.subr.mxu0 0.0
    %149 = vmatpush1.msra.mxu0 0.0
    %150 = vmatprep.subr.mxu0 0.0
    %151 = vmatpush1.msra.mxu0 0.0
    %152 = vmatprep.subr.mxu0 0.0
    %153 = vmatpush1.msra.mxu0 0.0
    %154 = vmatprep.subr.mxu0 0.0
    %155 = vmatpush1.msra.mxu0 0.0
    %156 = vmatprep.subr.mxu0 0.0
    %157 = vmatpush1.msra.mxu0 0.0
    %158 = vmatprep.subr.mxu0 0.0
    %159 = vmatpush1.msra.mxu0 0.0
    %160 = vmatprep.subr.mxu0 0.0
    %161 = vmatpush1.msra.mxu0 0.0
    %162 = vmatprep.subr.mxu0 0.0
    %163 = vmatpush1.msra.mxu0 0.0
    %164 = vmatprep.subr.mxu0 0.0
    %165 = vmatpush1.msra.mxu0 0.0
    %166 = vmatprep.subr.mxu0 0.0
    %167 = vmatpush1.msra.mxu0 0.0
    %168 = vmatprep.subr.mxu0 0.0
    %169 = vmatpush1.msra.mxu0 0.0
    %170 = vmatprep.subr.mxu0 0.0
    %171 = vmatpush1.msra.mxu0 0.0
    %172 = vmatprep.subr.mxu0 0.0
    %173 = vmatpush1.msra.mxu0 0.0
    %174 = vmatprep.subr.mxu0 0.0
    %175 = vmatpush1.msra.mxu0 0.0
    %176 = vmatprep.subr.mxu0 0.0
    %177 = vmatpush1.msra.mxu0 0.0
    %178 = vmatprep.subr.mxu0 0.0
    %179 = vmatpush1.msra.mxu0 0.0
    %180 = vmatprep.mubr.f32.mxu0 0.0
    %181 = vmatmul.mubr.f32.gmra.mrb[0].mxu0 %v111
    %v182 = vpop.f32.mrb[0].mxu0
    %v183 = vadd.f32 0.0, %v182
    %v184 = vpop.f32.mrb[0].mxu0
    %185 = vmatprep.mubr.f32.mxu0 0.0
    %186 = vmatmul.mubr.f32.gmra.mrb[0].mxu0 %v114
    %v187 = vpop.f32.mrb[0].mxu0
    %v188 = vadd.f32 0.0, %v187
    %v189 = vpop.f32.mrb[0].mxu0
    %190 = vdwg.mxu0
    %v191 = vadd.f32 %v104, %v183
    %v192 = vadd.f32 %v105, %v188
    %vm193 = vcmask 785408
    %194 = vst.msk [vmem:[#allocation2] sm:$0xff] %vm193, %v191
    %195 = vst.msk [vmem:[#allocation2 + $0x8] sm:$0xff] %vm193, %v192
    // Predicated region
    $region34: #{tpu_custom_call.1} parent=1 // pred_check
      %p196 = pneg %p49
    $region35: #{tpu_custom_call.1} parent=1 // pred_check_branch
      %198 = sbr.rel (%p196) target = $region37
    $region36: #{tpu_custom_call.1} parent=1 // pred_region
      %v199 = vld [vmem:[#allocation2] sm:$0xff]
      %v200 = vld [vmem:[#allocation2 + $0x8] sm:$0xff]
      %v201 = vld [vmem:[%s4] sm:$0x1]
      %v203 = vlaneseq
      %v204 = vshrl.u32 %v203, 7
      %v205 = vsub.s32 0, %v204
      %v206 = vrot.slane %v201, %v205
      %v208 = vadd.f32 %v199, %v206
      %v209 = vadd.f32 %v200, %v206
      %210 = vst.msk [vmem:[#allocation8] sm:$0xff] %vm193, %v208
      %211 = vst.msk [vmem:[#allocation8 + $0x8] sm:$0xff] %vm193, %v209
    $region37: #{tpu_custom_call.1} parent=1 // pred_fallthru
      _
    // Predicated region
    $region38: #{tpu_custom_call.1} parent=1 // pred_check
      _
    $region39: #{tpu_custom_call.1} parent=1 // pred_check_branch
      %213 = sbr.rel (0) target = $region41
    $region40: #{tpu_custom_call.1} parent=1 // pred_region
      %s215 = ssub.s32 256, 256
      %216 = vsyncadd [#allocation5], %s215
      %s217 = sshll.u32 [#allocation8], 4
      %s218 = int_to_ptr.vmem [resolvable:$true] %s217
      %223 = dma.vmem_to_hbm [thread:$0]  %s218, 256, %s5, [#allocation5], 128, 128, 8
    $region41: #{tpu_custom_call.1} parent=1 // pred_fallthru
      _
    // Predicated region
    $region42: #{tpu_custom_call.1} parent=1 // pred_check
      _
    $region43: #{tpu_custom_call.1} parent=1 // pred_check_branch
      %225 = sbr.rel (0) target = $region45
    $region44: #{tpu_custom_call.1} parent=1 // pred_region
      %226 = dma.done [#allocation5], 256
    $region45: #{tpu_custom_call.1} parent=1 // pred_fallthru
      _
    %227 = vsyncpa [#allocation4], 1
    %228 = vsyncpa [#allocation7], 1
    %229 = vsyncpa [#allocation5], 1

</llo_original>
